<compile_context>
chip_gen: v5e
topology: v5e:2x2
jax: 0.10.0
libtpu: 0.0.40
codegen_flags: <defaults>
</compile_context>

<pallas_src>
import numpy as np
import jax
import jax.numpy as jnp
from jax import lax
from jax.experimental import pallas as pl
from jax.experimental.pallas import tpu as pltpu


def cbam_kernel(x_ref, w1t_ref, w2t_ref, m_ref, o_ref):
    """One batch tile.

    x_ref/o_ref : (TB, C, HW) f32
    w1t_ref     : (C, Cr) f32   (first MLP layer, pre-transposed)
    w2t_ref     : (Cr, C) f32   (second MLP layer, pre-transposed)
    m_ref       : (2*HW, HW) bf16 stacked im2col matrix; rows [0, HW) act on the
                  channel-mean map, rows [HW, 2*HW) on the channel-max map.
    """
    x = x_ref[...]                                         # (TB, C, HW) f32
    tb = x.shape[0]

    # ---------------- Channel attention (batched over the whole tile) ----------------
    avg_c = jnp.mean(x, axis=2)                            # (TB, C)  lane reduction (XLU)
    max_c = jnp.max(x, axis=2)                             # (TB, C)
    pooled = jnp.concatenate([avg_c, max_c], axis=0)       # (2*TB, C)
    # ONE first-layer matmul for all avg AND max vectors, fold halves, ONE second layer.
    h = jnp.maximum(
        jnp.dot(pooled, w1t_ref[...], preferred_element_type=jnp.float32), 0.0)  # (2*TB, Cr)
    h = h[:tb] + h[tb:]                                    # (TB, Cr)
    ca = jax.nn.sigmoid(
        jnp.dot(h, w2t_ref[...], preferred_element_type=jnp.float32))            # (TB, C)
    x1 = x * ca[:, :, None]                                # (TB, C, HW) lane broadcast

    # ---------------- Spatial attention (batched over the whole tile) ----------------
    avg_s = jnp.mean(x1, axis=1)                           # (TB, HW) sublane reduction
    max_s = jnp.max(x1, axis=1)                            # (TB, HW)
    sm = jnp.concatenate([avg_s, max_s], axis=1)           # (TB, 2*HW), 128-aligned concat
    # Fused 7x7 conv (padding=3, no bias) over both conv-input channels for the whole
    # tile: one (TB, 2HW) @ (2HW, HW) MXU matmul, bf16 operands, f32 accumulation.
    s = jnp.dot(sm.astype(m_ref.dtype), m_ref[...],
                preferred_element_type=jnp.float32)        # (TB, HW) f32
    sa = jax.nn.sigmoid(s)                                 # (TB, HW) f32 (EUP)

    o_ref[...] = (x1 * sa[:, None, :]).astype(o_ref.dtype)


def _conv7x7_to_matrix(wc, H, W, pad=3):
    """Build M with out_flat[p] = sum_q in_flat[q] * M[q, p] for one conv input channel."""
    K = wc.shape[0]
    HW = H * W
    M = np.zeros((HW, HW), dtype=np.float32)
    for i in range(H):
        for j in range(W):
            p = i * W + j
            for ki in range(K):
                for kj in range(K):
                    ii = i + ki - pad
                    jj = j + kj - pad
                    if 0 <= ii < H and 0 <= jj < W:
                        M[ii * W + jj, p] = wc[ki, kj]
    return M


def cbam_pallas(x, w1, w2, wsa, *, batch_tile=8):
    """x: (N, C, H, W) f32 NCHW.  w1: (C//r, C).  w2: (C, C//r).  wsa: (1, 2, 7, 7).

    NOTE: the im2col matrix is built on the host from a CONCRETE `wsa` (frozen conv
    weights); this function must not be jit-wrapped with `wsa` as a traced argument,
    and gradients do not flow through the spatial conv weights.
    Assumes H*W is a multiple of 128 for lane-dense spatial layout (256 here).
    """
    N, C, H, W = x.shape
    HW = H * W
    Cr = w1.shape[0]

    x_flat = jnp.asarray(x, jnp.float32).reshape(N, C, HW)
    w1t = jnp.asarray(w1, jnp.float32).T                    # (C, Cr)
    w2t = jnp.asarray(w2, jnp.float32).T                    # (Cr, C)

    wsa_np = np.asarray(wsa, dtype=np.float32)
    # Stacked im2col matrix (rows [0,HW) = avg channel, [HW,2HW) = max channel, matching
    # torch.cat([avg, max], dim=1)).  Stored bf16: it dominates HBM bytes (O(HW^2)).
    m_stack = jnp.asarray(
        np.concatenate([_conv7x7_to_matrix(wsa_np[0, 0], H, W),
                        _conv7x7_to_matrix(wsa_np[0, 1], H, W)], axis=0),
        dtype=jnp.bfloat16)                                 # (2*HW, HW)

    tb = min(batch_tile, N)
    grid = (pl.cdiv(N, tb),)

    out_flat = pl.pallas_call(
        cbam_kernel,
        out_shape=jax.ShapeDtypeStruct((N, C, HW), jnp.float32),
        grid_spec=pltpu.PrefetchScalarGridSpec(
            num_scalar_prefetch=0,
            grid=grid,
            in_specs=[
                pl.BlockSpec((tb, C, HW), lambda i: (i, 0, 0)),   # x: batch-tiled, pipelined
                pl.BlockSpec((C, Cr), lambda i: (0, 0)),          # weights stay resident
                pl.BlockSpec((Cr, C), lambda i: (0, 0)),
                pl.BlockSpec((2 * HW, HW), lambda i: (0, 0)),     # im2col matrix resident
            ],
            out_specs=pl.BlockSpec((tb, C, HW), lambda i: (i, 0, 0)),
        ),
        compiler_params=pltpu.CompilerParams(
            # Batch axis is embarrassingly parallel -> both TCs on v7x.
            dimension_semantics=("parallel",),
            # Explicit (generous) scoped-VMEM limit; needed footprint here is ~1 MiB,
            # raise further if the im2col path is kept at larger HW.
            vmem_limit_bytes=32 * 1024 * 1024,
        ),
    )(x_flat, w1t, w2t, m_stack)

    return out_flat.reshape(N, C, H, W)


def cbam_reference(x, w1, w2, wsa):
    """Pure-JAX reference matching the PyTorch CBAM forward semantics."""
    avg = jnp.mean(x, axis=(2, 3))                          # (N, C)
    mx = jnp.max(x, axis=(2, 3))                            # (N, C)

    def mlp(v):
        return jnp.maximum(v @ w1.T, 0.0) @ w2.T

    ca = jax.nn.sigmoid(mlp(avg) + mlp(mx))[:, :, None, None]
    x1 = ca * x
    a = jnp.mean(x1, axis=1, keepdims=True)
    m = jnp.max(x1, axis=1, keepdims=True)
    inp = jnp.concatenate([a, m], axis=1)                   # (N, 2, H, W)
    s = lax.conv_general_dilated(
        inp, wsa, window_strides=(1, 1), padding=[(3, 3), (3, 3)],
        dimension_numbers=("NCHW", "OIHW", "NCHW"))
    sa = jax.nn.sigmoid(s)
    return sa * x1


if __name__ == "__main__":
    key = jax.random.PRNGKey(0)
    k1, k2, k3, k4 = jax.random.split(key, 4)

    # planes=32, ratio=16 -> hidden=2 ; spatial 16x16 (HW=256, lane-aligned) ; batch 2
    N, C, H, W = 2, 32, 16, 16
    ratio = 16
    Cr = C // ratio

    x = jax.random.normal(k1, (N, C, H, W), dtype=jnp.float32)
    # Deterministic synthetic parameters (shapes match the nn.Conv2d weights, squeezed):
    w1 = jax.random.normal(k2, (Cr, C), dtype=jnp.float32) * 0.2        # Conv2d(C, C//r, 1)
    w2 = jax.random.normal(k3, (C, Cr), dtype=jnp.float32) * 0.2        # Conv2d(C//r, C, 1)
    wsa = jax.random.normal(k4, (1, 2, 7, 7), dtype=jnp.float32) * 0.1  # Conv2d(2, 1, 7)

    out = jax.block_until_ready(cbam_pallas(x, w1, w2, wsa))
    ref = cbam_reference(x, w1, w2, wsa)

    assert out.shape == (N, C, H, W)
    assert np.allclose(np.asarray(out), np.asarray(ref), atol=2e-2, rtol=2e-2), \
        "Pallas CBAM output mismatches reference"

    print("KERNEL_OK")
</pallas_src>

<mosaic_0001>
module attributes {stable_mosaic.version = 11 : i64} {
  func.func @cbam_kernel(%arg0: i32, %arg1: memref<2x32x256xf32, #tpu.memory_space<vmem>>, %arg2: memref<32x2xf32, #tpu.memory_space<vmem>>, %arg3: memref<2x32xf32, #tpu.memory_space<vmem>>, %arg4: memref<512x256xbf16, #tpu.memory_space<vmem>>, %arg5: memref<2x32x256xf32, #tpu.memory_space<vmem>>) attributes {dimension_semantics = [#tpu.dimension_semantics<parallel>], iteration_bounds = array<i64: 1>, scalar_prefetch = 0 : i64, scratch_operands = 0 : i64, tpu.core_type = #tpu.core_type<tc>, window_params = [{transform_indices = @transform_0, window_bounds = array<i64: 2, 32, 256>}, {pipeline_mode = #tpu.pipeline_mode<synchronous>, transform_indices = @transform_1, window_bounds = array<i64: 32, 2>}, {pipeline_mode = #tpu.pipeline_mode<synchronous>, transform_indices = @transform_2, window_bounds = array<i64: 2, 32>}, {pipeline_mode = #tpu.pipeline_mode<synchronous>, transform_indices = @transform_3, window_bounds = array<i64: 512, 256>}, {transform_indices = @transform_4, window_bounds = array<i64: 2, 32, 256>}]} {
    %c0 = arith.constant 0 : index
    %c0_0 = arith.constant 0 : index
    %c0_1 = arith.constant 0 : index
    %0 = vector.load %arg1[%c0, %c0_0, %c0_1] : memref<2x32x256xf32, #tpu.memory_space<vmem>>, vector<2x32x256xf32>
    %cst = arith.constant dense<0.000000e+00> : vector<2x32xf32>
    %1 = vector.multi_reduction <add>, %0, %cst [2] : vector<2x32x256xf32> to vector<2x32xf32>
    %cst_2 = arith.constant 2.560000e+02 : f32
    %2 = vector.broadcast %cst_2 : f32 to vector<2x32xf32>
    %3 = arith.divf %1, %2 : vector<2x32xf32>
    %cst_3 = arith.constant dense<0xFF800000> : vector<2x32xf32>
    %4 = vector.multi_reduction <maximumf>, %0, %cst_3 [2] : vector<2x32x256xf32> to vector<2x32xf32>
    %5 = tpu.concatenate %3, %4 in 0 : vector<2x32xf32>, vector<2x32xf32> -> vector<4x32xf32>
    %c0_4 = arith.constant 0 : index
    %c0_5 = arith.constant 0 : index
    %6 = vector.load %arg2[%c0_4, %c0_5] : memref<32x2xf32, #tpu.memory_space<vmem>>, vector<32x2xf32>
    %cst_6 = arith.constant dense<0.000000e+00> : vector<4x2xf32>
    %7 = tpu.matmul %5, %6, %cst_6 {dimension_numbers = #tpu.dot_dimension_numbers<[1], [0], [0], [1], [0, 0, 1, 1], [], []>} : vector<4x32xf32>, vector<32x2xf32>, vector<4x2xf32> -> vector<4x2xf32>
    %cst_7 = arith.constant 0.000000e+00 : f32
    %8 = vector.broadcast %cst_7 : f32 to vector<4x2xf32>
    %9 = arith.maximumf %7, %8 : vector<4x2xf32>
    %10 = vector.extract_strided_slice %9 {offsets = [0, 0], sizes = [2, 2], strides = [1, 1]} : vector<4x2xf32> to vector<2x2xf32>
    %11 = vector.extract_strided_slice %9 {offsets = [2, 0], sizes = [2, 2], strides = [1, 1]} : vector<4x2xf32> to vector<2x2xf32>
    %12 = arith.addf %10, %11 : vector<2x2xf32>
    %c0_8 = arith.constant 0 : index
    %c0_9 = arith.constant 0 : index
    %13 = vector.load %arg3[%c0_8, %c0_9] : memref<2x32xf32, #tpu.memory_space<vmem>>, vector<2x32xf32>
    %cst_10 = arith.constant dense<0.000000e+00> : vector<2x32xf32>
    %14 = tpu.matmul %12, %13, %cst_10 {dimension_numbers = #tpu.dot_dimension_numbers<[1], [0], [0], [1], [0, 0, 1, 1], [], []>} : vector<2x2xf32>, vector<2x32xf32>, vector<2x32xf32> -> vector<2x32xf32>
    %15 = arith.negf %14 : vector<2x32xf32>
    %16 = math.exp %15 : vector<2x32xf32>
    %cst_11 = arith.constant 1.000000e+00 : f32
    %17 = vector.broadcast %cst_11 : f32 to vector<2x32xf32>
    %18 = arith.addf %17, %16 : vector<2x32xf32>
    %19 = arith.divf %17, %18 : vector<2x32xf32>
    %20 = vector.shape_cast %19 : vector<2x32xf32> to vector<2x32x1xf32>
    %21 = vector.broadcast %20 : vector<2x32x1xf32> to vector<2x32x256xf32>
    %22 = arith.mulf %0, %21 : vector<2x32x256xf32>
    %cst_12 = arith.constant dense<0.000000e+00> : vector<2x256xf32>
    %23 = vector.multi_reduction <add>, %22, %cst_12 [1] : vector<2x32x256xf32> to vector<2x256xf32>
    %cst_13 = arith.constant 3.200000e+01 : f32
    %24 = vector.broadcast %cst_13 : f32 to vector<2x256xf32>
    %25 = arith.divf %23, %24 : vector<2x256xf32>
    %cst_14 = arith.constant dense<0xFF800000> : vector<2x256xf32>
    %26 = vector.multi_reduction <maximumf>, %22, %cst_14 [1] : vector<2x32x256xf32> to vector<2x256xf32>
    %27 = tpu.concatenate %25, %26 in 1 : vector<2x256xf32>, vector<2x256xf32> -> vector<2x512xf32>
    %28 = arith.truncf %27 : vector<2x512xf32> to vector<2x512xbf16>
    %c0_15 = arith.constant 0 : index
    %c0_16 = arith.constant 0 : index
    %29 = vector.load %arg4[%c0_15, %c0_16] : memref<512x256xbf16, #tpu.memory_space<vmem>>, vector<512x256xbf16>
    %cst_17 = arith.constant dense<0.000000e+00> : vector<2x256xf32>
    %30 = tpu.matmul %28, %29, %cst_17 {dimension_numbers = #tpu.dot_dimension_numbers<[1], [0], [0], [1], [0, 0, 1, 1], [], []>} : vector<2x512xbf16>, vector<512x256xbf16>, vector<2x256xf32> -> vector<2x256xf32>
    %31 = arith.negf %30 : vector<2x256xf32>
    %32 = math.exp %31 : vector<2x256xf32>
    %cst_18 = arith.constant 1.000000e+00 : f32
    %33 = vector.broadcast %cst_18 : f32 to vector<2x256xf32>
    %34 = arith.addf %33, %32 : vector<2x256xf32>
    %35 = arith.divf %33, %34 : vector<2x256xf32>
    %36 = vector.shape_cast %35 : vector<2x256xf32> to vector<2x1x256xf32>
    %37 = vector.broadcast %36 : vector<2x1x256xf32> to vector<2x32x256xf32>
    %38 = arith.mulf %22, %37 : vector<2x32x256xf32>
    %c0_19 = arith.constant 0 : index
    %c0_20 = arith.constant 0 : index
    %c0_21 = arith.constant 0 : index
    %39 = vector.load %arg5[%c0_19, %c0_20, %c0_21] : memref<2x32x256xf32, #tpu.memory_space<vmem>>, vector<2x32x256xf32>
    tpu.vector_store %arg5[%c0_19, %c0_20, %c0_21], %38 {strides = array<i32>} : memref<2x32x256xf32, #tpu.memory_space<vmem>>, vector<2x32x256xf32>,
    return
  }
  func.func @transform_0(%arg0: i32) -> (i32, i32, i32) {
    %c0_i32 = arith.constant 0 : i32
    %c0_i32_0 = arith.constant 0 : i32
    %c0_i32_1 = arith.constant 0 : i32
    return %arg0, %c0_i32, %c0_i32_0 : i32, i32, i32
  }
  func.func @transform_1(%arg0: i32) -> (i32, i32) {
    %c0_i32 = arith.constant 0 : i32
    %c0_i32_0 = arith.constant 0 : i32
    %c0_i32_1 = arith.constant 0 : i32
    return %c0_i32, %c0_i32_0 : i32, i32
  }
  func.func @transform_2(%arg0: i32) -> (i32, i32) {
    %c0_i32 = arith.constant 0 : i32
    %c0_i32_0 = arith.constant 0 : i32
    %c0_i32_1 = arith.constant 0 : i32
    return %c0_i32, %c0_i32_0 : i32, i32
  }
  func.func @transform_3(%arg0: i32) -> (i32, i32) {
    %c0_i32 = arith.constant 0 : i32
    %c0_i32_0 = arith.constant 0 : i32
    %c0_i32_1 = arith.constant 0 : i32
    return %c0_i32, %c0_i32_0 : i32, i32
  }
  func.func @transform_4(%arg0: i32) -> (i32, i32, i32) {
    %c0_i32 = arith.constant 0 : i32
    %c0_i32_0 = arith.constant 0 : i32
    %c0_i32_1 = arith.constant 0 : i32
    return %arg0, %c0_i32, %c0_i32_0 : i32, i32, i32
  }
}

</mosaic_0001>

<llo_original>
// kernel: tpu_custom_call.1
$region0: #{tpu_custom_call.1}
  #allocation0 [shape = 'u32[]', space=smem, size = 0x4, offset = 0x4, fixed_abs, tag = 'smem constant byte address 0x4 - core index']
  #allocation1 [shape = 'u32[72,128]{1,0:T(1,128)}', space=vmem, size = 0x9000, scoped, tag = 'internal scratch']
  %s0 = inlined_call_operand.hbm [shape: f32[2,32,256], index: 0, kind: input, shape index: {}]
  %s1 = inlined_call_operand.vmem [shape: f32[32,2], index: 1, kind: input, shape index: {}]
  %s2 = inlined_call_operand.vmem [shape: f32[2,32], index: 2, kind: input, shape index: {}]
  %s3 = inlined_call_operand.hbm [shape: bf16[512,256], index: 3, kind: input, shape index: {}]
  %s4 = inlined_call_operand.hbm [shape: f32[2,32,256], index: 4, kind: output, shape index: {}]
  %s5 = sld [smem:[#allocation0]]
  $region34: #{tpu_custom_call.1} parent=0
    _
  %s7 = ssub.s32 1, %s5
  %s8 = scalar_select 0, %s7, %s5
  $region1: #{tpu_custom_call.1} parent=0
    #allocation2 [shape = 'u8[65536]{0}', space=vmem, size = 0x10000, scoped, tag = 'input window, operand 0, single buffered']
    #allocation3 [shape = 's32[1]{0}', space=sflag, size = 0x4, scoped, tag = 'scoped memory for tpu_custom_call.1']
    #allocation4 [shape = 's32[1]{0}', space=sflag, size = 0x4, scoped, tag = 'scoped memory for tpu_custom_call.1']
    #allocation5 [shape = 'u8[262144]{0}', space=vmem, size = 0x40000, scoped, tag = 'input window, operand 3, single buffered']
    #allocation6 [shape = 's32[1]{0}', space=sflag, size = 0x4, scoped, tag = 'scoped memory for tpu_custom_call.1']
    #allocation7 [shape = 'u8[65536]{0}', space=vmem, size = 0x10000, scoped, tag = 'output window, operand 0, single buffered']
    %9 = vsyncpa [#allocation3], 0
    %10 = vsyncpa [#allocation6], 0
    %11 = vsyncpa [#allocation4], 0
    // Predicated region
    $region2: #{tpu_custom_call.1} parent=1 // pred_check
      _
    $region3: #{tpu_custom_call.1} parent=1 // pred_check_branch
      %13 = sbr.rel (0) target = $region5
    $region4: #{tpu_custom_call.1} parent=1 // pred_region
      %15 = vsyncadd [#allocation3], 0
      %s16 = sshll.u32 %s0, 4
      %s17 = int_to_ptr.hbm [resolvable:$true] %s16
      %s18 = sshll.u32 [#allocation2], 4
      %s19 = int_to_ptr.vmem [resolvable:$true] %s18
      %24 = dma.hbm_to_vmem [thread:$0]  %s17, 2048, %s19, [#allocation3], 256, 256, 16
    $region5: #{tpu_custom_call.1} parent=1 // pred_fallthru
      _
    // Predicated region
    $region6: #{tpu_custom_call.1} parent=1 // pred_check
      _
    $region7: #{tpu_custom_call.1} parent=1 // pred_check_branch
      %26 = sbr.rel (0) target = $region9
    $region8: #{tpu_custom_call.1} parent=1 // pred_region
      _
    $region9: #{tpu_custom_call.1} parent=1 // pred_fallthru
      _
    // Predicated region
    $region10: #{tpu_custom_call.1} parent=1 // pred_check
      _
    $region11: #{tpu_custom_call.1} parent=1 // pred_check_branch
      %28 = sbr.rel (0) target = $region13
    $region12: #{tpu_custom_call.1} parent=1 // pred_region
      _
    $region13: #{tpu_custom_call.1} parent=1 // pred_fallthru
      _
    // Predicated region
    $region14: #{tpu_custom_call.1} parent=1 // pred_check
      _
    $region15: #{tpu_custom_call.1} parent=1 // pred_check_branch
      %30 = sbr.rel (0) target = $region17
    $region16: #{tpu_custom_call.1} parent=1 // pred_region
      %32 = vsyncadd [#allocation6], 0
      %s33 = sshll.u32 %s3, 4
      %s34 = int_to_ptr.hbm [resolvable:$true] %s33
      %s35 = sshll.u32 [#allocation5], 4
      %s36 = int_to_ptr.vmem [resolvable:$true] %s35
      %41 = dma.hbm_to_vmem [thread:$0]  %s34, 8192, %s36, [#allocation6], 128, 128, 8
    $region17: #{tpu_custom_call.1} parent=1 // pred_fallthru
      _
    // Predicated region
    $region18: #{tpu_custom_call.1} parent=1 // pred_check
      _
    $region19: #{tpu_custom_call.1} parent=1 // pred_check_branch
      %43 = sbr.rel (0) target = $region21
    $region20: #{tpu_custom_call.1} parent=1 // pred_region
      %45 = dma.done [#allocation3], 2048
    $region21: #{tpu_custom_call.1} parent=1 // pred_fallthru
      _
    // Predicated region
    $region22: #{tpu_custom_call.1} parent=1 // pred_check
      _
    $region23: #{tpu_custom_call.1} parent=1 // pred_check_branch
      %47 = sbr.rel (0) target = $region25
    $region24: #{tpu_custom_call.1} parent=1 // pred_region
      %49 = dma.done [#allocation6], 8192
    $region25: #{tpu_custom_call.1} parent=1 // pred_fallthru
      _
    %v50 = vld [vmem:[#allocation2] sm:$0xff]
    %v51 = vld [vmem:[#allocation2 + $0x8] sm:$0xff]
    %v52 = vld [vmem:[#allocation2 + $0x10] sm:$0xff]
    %v53 = vld [vmem:[#allocation2 + $0x18] sm:$0xff]
    %v54 = vld [vmem:[#allocation2 + $0x20] sm:$0xff]
    %v55 = vld [vmem:[#allocation2 + $0x28] sm:$0xff]
    %v56 = vld [vmem:[#allocation2 + $0x30] sm:$0xff]
    %v57 = vld [vmem:[#allocation2 + $0x38] sm:$0xff]
    %v58 = vld [vmem:[#allocation2 + $0x40] sm:$0xff]
    %v59 = vld [vmem:[#allocation2 + $0x48] sm:$0xff]
    %v60 = vld [vmem:[#allocation2 + $0x50] sm:$0xff]
    %v61 = vld [vmem:[#allocation2 + $0x58] sm:$0xff]
    %v62 = vld [vmem:[#allocation2 + $0x60] sm:$0xff]
    %v63 = vld [vmem:[#allocation2 + $0x68] sm:$0xff]
    %v64 = vld [vmem:[#allocation2 + $0x70] sm:$0xff]
    %v65 = vld [vmem:[#allocation2 + $0x78] sm:$0xff]
    %v66 = vadd.f32 %v50, %v51
    %67 = vadd.xlane.f32.xlu0 %v66
    %v68 = vpop.xlane.xlu0 %67
    %v69 = vadd.f32 %v52, %v53
    %70 = vadd.xlane.f32.xlu0 %v69
    %v71 = vpop.xlane.xlu0 %70
    %v72 = vadd.f32 %v54, %v55
    %73 = vadd.xlane.f32.xlu0 %v72
    %v74 = vpop.xlane.xlu0 %73
    %v75 = vadd.f32 %v56, %v57
    %76 = vadd.xlane.f32.xlu0 %v75
    %v77 = vpop.xlane.xlu0 %76
    %v78 = vadd.f32 %v58, %v59
    %79 = vadd.xlane.f32.xlu0 %v78
    %v80 = vpop.xlane.xlu0 %79
    %v81 = vadd.f32 %v60, %v61
    %82 = vadd.xlane.f32.xlu0 %v81
    %v83 = vpop.xlane.xlu0 %82
    %v84 = vadd.f32 %v62, %v63
    %85 = vadd.xlane.f32.xlu0 %v84
    %v86 = vpop.xlane.xlu0 %85
    %v87 = vadd.f32 %v64, %v65
    %88 = vadd.xlane.f32.xlu0 %v87
    %v89 = vpop.xlane.xlu0 %88
    %v90 = vrcp.pop 256.0
    %v91 = vmul.f32 256.0, %v90
    %v92 = vsub.f32 1.0, %v91
    %v93 = vmul.f32 %v90, %v92
    %v94 = vadd.f32 %v90, %v93
    %vm95 = vweird.f32 %v90
    %v96 = vsel %vm95, %v90, %v94
    %v97 = vmul.f32 %v68, %v96
    %v98 = vmul.f32 %v71, %v96
    %v99 = vmul.f32 %v74, %v96
    %v100 = vmul.f32 %v77, %v96
    %v101 = vmul.f32 %v80, %v96
    %v102 = vmul.f32 %v83, %v96
    %v103 = vmul.f32 %v86, %v96
    %v104 = vmul.f32 %v89, %v96
    %v105 = vmax.f32 %v50, %v51
    %106 = vmax.xlane.f32.xlu0 %v105
    %v107 = vpop.xlane.xlu0 %106
    %v108 = vmax.f32 %v52, %v53
    %109 = vmax.xlane.f32.xlu0 %v108
    %v110 = vpop.xlane.xlu0 %109
    %v111 = vmax.f32 %v54, %v55
    %112 = vmax.xlane.f32.xlu0 %v111
    %v113 = vpop.xlane.xlu0 %112
    %v114 = vmax.f32 %v56, %v57
    %115 = vmax.xlane.f32.xlu0 %v114
    %v116 = vpop.xlane.xlu0 %115
    %v117 = vmax.f32 %v58, %v59
    %118 = vmax.xlane.f32.xlu0 %v117
    %v119 = vpop.xlane.xlu0 %118
    %v120 = vmax.f32 %v60, %v61
    %121 = vmax.xlane.f32.xlu0 %v120
    %v122 = vpop.xlane.xlu0 %121
    %v123 = vmax.f32 %v62, %v63
    %124 = vmax.xlane.f32.xlu0 %v123
    %v125 = vpop.xlane.xlu0 %124
    %v126 = vmax.f32 %v64, %v65
    %127 = vmax.xlane.f32.xlu0 %v126
    %v128 = vpop.xlane.xlu0 %127
    %v137 = vlaneseq
    %v138 = vand.u32 %v137, 127
    %v139 = vperm.slane %v97, %v138
    %v140 = vadd.s32 %v138, 4294967288
    %v141 = vperm.slane %v98, %v140
    %vm142 = vcmask 130112
    %v143 = vsel %vm142, %v141, %v139
    %v144 = vadd.s32 %v138, 4294967280
    %v145 = vperm.slane %v99, %v144
    %vm146 = vcmask 195712
    %v147 = vsel %vm146, %v145, %v143
    %v148 = vadd.s32 %v138, 4294967272
    %v149 = vperm.slane %v100, %v148
    %vm150 = vcmask 261312
    %v151 = vsel %vm150, %v149, %v147
    %v152 = vperm.slane %v101, %v138
    %v153 = vperm.slane %v102, %v140
    %v154 = vsel %vm142, %v153, %v152
    %v155 = vperm.slane %v103, %v144
    %v156 = vsel %vm146, %v155, %v154
    %v157 = vperm.slane %v104, %v148
    %v158 = vsel %vm150, %v157, %v156
    %vm159 = vcmask 1041409
    %v160 = vsel %vm159, %v158, %v151
    %v170 = vperm.slane %v107, %v138
    %v171 = vperm.slane %v110, %v140
    %v172 = vsel %vm142, %v171, %v170
    %v173 = vperm.slane %v113, %v144
    %v174 = vsel %vm146, %v173, %v172
    %v175 = vperm.slane %v116, %v148
    %v176 = vsel %vm150, %v175, %v174
    %v177 = vperm.slane %v119, %v138
    %v178 = vperm.slane %v122, %v140
    %v179 = vsel %vm142, %v178, %v177
    %v180 = vperm.slane %v125, %v144
    %v181 = vsel %vm146, %v180, %v179
    %v182 = vperm.slane %v128, %v148
    %v183 = vsel %vm150, %v182, %v181
    %vm184 = vcmask 1043459
    %v185 = vsel %vm184, %v183, %v176
    %vm187 = vcmask 1041408
    %v188 = vsel %vm187, %v160, %v185
    %v189 = vld [vmem:[%s1] sm:$0xff]
    %v190 = vld [vmem:[%s1 + $0x8] sm:$0xff]
    %v191 = vld [vmem:[%s1 + $0x10] sm:$0xff]
    %v192 = vld [vmem:[%s1 + $0x18] sm:$0xff]
    %vm193 = vcmask 261120
    %v195 = vsel %vm193, %v188, 0
    %197 = vmatpush.msra.mxu0 0.0
    %198 = vmatpush.msra.mxu0 0.0
    %199 = vmatpush.msra.mxu0 0.0
    %200 = vmatpush.msra.mxu0 0.0
    %201 = vmatpush.msra.mxu0 0.0
    %202 = vmatpush.msra.mxu0 0.0
    %203 = vmatpush.msra.mxu0 0.0
    %204 = vmatpush.msra.mxu0 0.0
    %205 = vmatpush.msra.mxu0 0.0
    %206 = vmatpush.msra.mxu0 0.0
    %207 = vmatpush.msra.mxu0 0.0
    %208 = vmatpush.msra.mxu0 0.0
    %209 = vmatpush.msra.mxu0 %v192
    %210 = vmatpush.msra.mxu0 %v191
    %211 = vmatpush.msra.mxu0 %v190
    %212 = vmatpush.msra.mxu0 %v189
    %213 = vmatmul.f32.gmra.mxu0 %v195
    %v214 = vpop.f32.mrf.mxu0
    %v215 = vadd.f32 0.0, %v214
    %216 = vdwg.mxu0
    %v217 = vmax.f32 %v215, 0.0
    %v219 = vrot.slane %v217, 2
    %v221 = vadd.f32 %v217, %v219
    %v222 = vld [vmem:[%s2] sm:$0x3]
    %vm223 = vcmask 15360
    %v225 = vsel %vm223, %v221, 0
    %v228 = vsel %vm187, %v222, 0
    %230 = vmatpush.msra.mxu0 0.0
    %231 = vmatpush.msra.mxu0 0.0
    %232 = vmatpush.msra.mxu0 0.0
    %233 = vmatpush.msra.mxu0 0.0
    %234 = vmatpush.msra.mxu0 0.0
    %235 = vmatpush.msra.mxu0 0.0
    %236 = vmatpush.msra.mxu0 0.0
    %237 = vmatpush.msra.mxu0 0.0
    %238 = vmatpush.msra.mxu0 0.0
    %239 = vmatpush.msra.mxu0 0.0
    %240 = vmatpush.msra.mxu0 0.0
    %241 = vmatpush.msra.mxu0 0.0
    %242 = vmatpush.msra.mxu0 0.0
    %243 = vmatpush.msra.mxu0 0.0
    %244 = vmatpush.msra.mxu0 0.0
    %245 = vmatpush.msra.mxu0 %v228
    %246 = vmatmul.f32.gmra.mxu0 %v225
    %v247 = vpop.f32.mrf.mxu0
    %v248 = vadd.f32 0.0, %v247
    %249 = vdwg.mxu0
    %v250 = vxor.u32 %v248, 2147483648
    %v251 = vmul.f32 %v250, 1.442695
    %v252 = vpow.pop %v251
    %v253 = vadd.f32 %v252, 1.0
    %v254 = vrcp.pop %v253
    %v255 = vmul.f32 %v253, %v254
    %v256 = vsub.f32 1.0, %v255
    %v257 = vmul.f32 %v254, %v256
    %v258 = vadd.f32 %v254, %v257
    %vm259 = vweird.f32 %v253
    %vm260 = vweird.f32 %v254
    %vm261 = vmor %vm259, %vm260
    %v262 = vsel %vm261, %v254, %v258
    %v263 = vand.u32 2147483647, %v253
    %vm264 = vcmp.eq.f32.partialorder %v263, 8.507059e+37
    %v265 = vand.u32 %v253, 2147483648
    %v266 = vor.u32 1.1754944e-38, %v265
    %v267 = vsel %vm264, %v266, %v262
    %v268 = vmul.f32 1.0, %v267
    %v269 = vperm.slane %v268, 0
    %v270 = vlaneseq
    %v271 = vshrl.u32 %v270, 7
    %273 = vset.pattern.permute.xlu0 %v271
    %274 = vperm.xlu0 %273, %v269
    %v275 = vpop.permute.xlu0 %274
    %v276 = vlaneseq
    %v277 = vshrl.u32 %v276, 7
    %v278 = vadd.s32 %v277, 8
    %279 = vset.pattern.permute.xlu0 %v278
    %280 = vperm.xlu0 %279, %v269
    %v281 = vpop.permute.xlu0 %280
    %v282 = vlaneseq
    %v283 = vshrl.u32 %v282, 7
    %v284 = vadd.s32 %v283, 16
    %285 = vset.pattern.permute.xlu0 %v284
    %286 = vperm.xlu0 %285, %v269
    %v287 = vpop.permute.xlu0 %286
    %v288 = vlaneseq
    %v289 = vshrl.u32 %v288, 7
    %v290 = vadd.s32 %v289, 24
    %291 = vset.pattern.permute.xlu0 %v290
    %292 = vperm.xlu0 %291, %v269
    %v293 = vpop.permute.xlu0 %292
    %v294 = vperm.slane %v268, 1
    %v295 = vlaneseq
    %v296 = vshrl.u32 %v295, 7
    %298 = vset.pattern.permute.xlu0 %v296
    %299 = vperm.xlu0 %298, %v294
    %v300 = vpop.permute.xlu0 %299
    %v301 = vlaneseq
    %v302 = vshrl.u32 %v301, 7
    %v303 = vadd.s32 %v302, 8
    %304 = vset.pattern.permute.xlu0 %v303
    %305 = vperm.xlu0 %304, %v294
    %v306 = vpop.permute.xlu0 %305
    %v307 = vlaneseq
    %v308 = vshrl.u32 %v307, 7
    %v309 = vadd.s32 %v308, 16
    %310 = vset.pattern.permute.xlu0 %v309
    %311 = vperm.xlu0 %310, %v294
    %v312 = vpop.permute.xlu0 %311
    %v313 = vlaneseq
    %v314 = vshrl.u32 %v313, 7
    %v315 = vadd.s32 %v314, 24
    %316 = vset.pattern.permute.xlu0 %v315
    %317 = vperm.xlu0 %316, %v294
    %v318 = vpop.permute.xlu0 %317
    %v319 = vmul.f32 %v50, %v275
    %v320 = vmul.f32 %v51, %v275
    %v321 = vmul.f32 %v52, %v281
    %v322 = vmul.f32 %v53, %v281
    %v323 = vmul.f32 %v54, %v287
    %v324 = vmul.f32 %v55, %v287
    %v325 = vmul.f32 %v56, %v293
    %v326 = vmul.f32 %v57, %v293
    %v327 = vmul.f32 %v58, %v300
    %v328 = vmul.f32 %v59, %v300
    %v329 = vmul.f32 %v60, %v306
    %v330 = vmul.f32 %v61, %v306
    %v331 = vmul.f32 %v62, %v312
    %v332 = vmul.f32 %v63, %v312
    %v333 = vmul.f32 %v64, %v318
    %v334 = vmul.f32 %v65, %v318
    %v335 = vadd.f32 %v319, %v321
    %v336 = vadd.f32 %v335, %v323
    %v337 = vadd.f32 %v336, %v325
    %v338 = vrot.slane %v337, 4
    %v339 = vadd.f32 %v337, %v338
    %v340 = vrot.slane %v339, 2
    %v341 = vadd.f32 %v339, %v340
    %v342 = vrot.slane %v341, 1
    %v343 = vadd.f32 %v341, %v342
    %v344 = vadd.f32 %v320, %v322
    %v345 = vadd.f32 %v344, %v324
    %v346 = vadd.f32 %v345, %v326
    %v347 = vrot.slane %v346, 4
    %v348 = vadd.f32 %v346, %v347
    %v349 = vrot.slane %v348, 2
    %v350 = vadd.f32 %v348, %v349
    %v351 = vrot.slane %v350, 1
    %v352 = vadd.f32 %v350, %v351
    %v353 = vadd.f32 %v327, %v329
    %v354 = vadd.f32 %v353, %v331
    %v355 = vadd.f32 %v354, %v333
    %v356 = vrot.slane %v355, 4
    %v357 = vadd.f32 %v355, %v356
    %v358 = vrot.slane %v357, 2
    %v359 = vadd.f32 %v357, %v358
    %v360 = vrot.slane %v359, 1
    %v361 = vadd.f32 %v359, %v360
    %v362 = vadd.f32 %v328, %v330
    %v363 = vadd.f32 %v362, %v332
    %v364 = vadd.f32 %v363, %v334
    %v365 = vrot.slane %v364, 4
    %v366 = vadd.f32 %v364, %v365
    %v367 = vrot.slane %v366, 2
    %v368 = vadd.f32 %v366, %v367
    %v369 = vrot.slane %v368, 1
    %v370 = vadd.f32 %v368, %v369
    %v371 = vrcp.pop 32.0
    %v372 = vmul.f32 32.0, %v371
    %v373 = vsub.f32 1.0, %v372
    %v374 = vmul.f32 %v371, %v373
    %v375 = vadd.f32 %v371, %v374
    %vm376 = vweird.f32 %v371
    %v377 = vsel %vm376, %v371, %v375
    %v378 = vmul.f32 %v343, %v377
    %v379 = vmul.f32 %v352, %v377
    %v380 = vmul.f32 %v361, %v377
    %v381 = vmul.f32 %v370, %v377
    %v382 = vmax.f32 %v319, %v321
    %v383 = vmax.f32 %v382, %v323
    %v384 = vmax.f32 %v383, %v325
    %v385 = vrot.slane %v384, 4
    %v386 = vmax.f32 %v384, %v385
    %v387 = vrot.slane %v386, 2
    %v388 = vmax.f32 %v386, %v387
    %v389 = vrot.slane %v388, 1
    %v390 = vmax.f32 %v388, %v389
    %v391 = vmax.f32 %v320, %v322
    %v392 = vmax.f32 %v391, %v324
    %v393 = vmax.f32 %v392, %v326
    %v394 = vrot.slane %v393, 4
    %v395 = vmax.f32 %v393, %v394
    %v396 = vrot.slane %v395, 2
    %v397 = vmax.f32 %v395, %v396
    %v398 = vrot.slane %v397, 1
    %v399 = vmax.f32 %v397, %v398
    %v400 = vmax.f32 %v327, %v329
    %v401 = vmax.f32 %v400, %v331
    %v402 = vmax.f32 %v401, %v333
    %v403 = vrot.slane %v402, 4
    %v404 = vmax.f32 %v402, %v403
    %v405 = vrot.slane %v404, 2
    %v406 = vmax.f32 %v404, %v405
    %v407 = vrot.slane %v406, 1
    %v408 = vmax.f32 %v406, %v407
    %v409 = vmax.f32 %v328, %v330
    %v410 = vmax.f32 %v409, %v332
    %v411 = vmax.f32 %v410, %v334
    %v412 = vrot.slane %v411, 4
    %v413 = vmax.f32 %v411, %v412
    %v414 = vrot.slane %v413, 2
    %v415 = vmax.f32 %v413, %v414
    %v416 = vrot.slane %v415, 1
    %v417 = vmax.f32 %v415, %v416
    %v422 = vsel %vm159, %v380, %v378
    %v423 = vsel %vm159, %v381, %v379
    %v430 = vsel %vm159, %v408, %v390
    %v431 = vsel %vm159, %v417, %v399
    %v434 = vpack.c.bf16 %v422, %v422
    %v435 = vpack.c.bf16 %v423, %v423
    %v436 = vpack.c.bf16 %v430, %v430
    %v437 = vpack.c.bf16 %v431, %v431
    %v438 = vld [vmem:[#allocation5] sm:$0xff]
    %v439 = vld [vmem:[#allocation5 + $0x8] sm:$0xff]
    %v440 = vld [vmem:[#allocation5 + $0x10] sm:$0xff]
    %v441 = vld [vmem:[#allocation5 + $0x18] sm:$0xff]
    %v442 = vld [vmem:[#allocation5 + $0x20] sm:$0xff]
    %v443 = vld [vmem:[#allocation5 + $0x28] sm:$0xff]
    %v444 = vld [vmem:[#allocation5 + $0x30] sm:$0xff]
    %v445 = vld [vmem:[#allocation5 + $0x38] sm:$0xff]
    %v446 = vld [vmem:[#allocation5 + $0x40] sm:$0xff]
    %v447 = vld [vmem:[#allocation5 + $0x48] sm:$0xff]
    %v448 = vld [vmem:[#allocation5 + $0x50] sm:$0xff]
    %v449 = vld [vmem:[#allocation5 + $0x58] sm:$0xff]
    %v450 = vld [vmem:[#allocation5 + $0x60] sm:$0xff]
    %v451 = vld [vmem:[#allocation5 + $0x68] sm:$0xff]
    %v452 = vld [vmem:[#allocation5 + $0x70] sm:$0xff]
    %v453 = vld [vmem:[#allocation5 + $0x78] sm:$0xff]
    %v454 = vld [vmem:[#allocation5 + $0x80] sm:$0xff]
    %v455 = vld [vmem:[#allocation5 + $0x88] sm:$0xff]
    %v456 = vld [vmem:[#allocation5 + $0x90] sm:$0xff]
    %v457 = vld [vmem:[#allocation5 + $0x98] sm:$0xff]
    %v458 = vld [vmem:[#allocation5 + $0xa0] sm:$0xff]
    %v459 = vld [vmem:[#allocation5 + $0xa8] sm:$0xff]
    %v460 = vld [vmem:[#allocation5 + $0xb0] sm:$0xff]
    %v461 = vld [vmem:[#allocation5 + $0xb8] sm:$0xff]
    %v462 = vld [vmem:[#allocation5 + $0xc0] sm:$0xff]
    %v463 = vld [vmem:[#allocation5 + $0xc8] sm:$0xff]
    %v464 = vld [vmem:[#allocation5 + $0xd0] sm:$0xff]
    %v465 = vld [vmem:[#allocation5 + $0xd8] sm:$0xff]
    %v466 = vld [vmem:[#allocation5 + $0xe0] sm:$0xff]
    %v467 = vld [vmem:[#allocation5 + $0xe8] sm:$0xff]
    %v468 = vld [vmem:[#allocation5 + $0xf0] sm:$0xff]
    %v469 = vld [vmem:[#allocation5 + $0xf8] sm:$0xff]
    %v470 = vld [vmem:[#allocation5 + $0x100] sm:$0xff]
    %v471 = vld [vmem:[#allocation5 + $0x108] sm:$0xff]
    %v472 = vld [vmem:[#allocation5 + $0x110] sm:$0xff]
    %v473 = vld [vmem:[#allocation5 + $0x118] sm:$0xff]
    %v474 = vld [vmem:[#allocation5 + $0x120] sm:$0xff]
    %v475 = vld [vmem:[#allocation5 + $0x128] sm:$0xff]
    %v476 = vld [vmem:[#allocation5 + $0x130] sm:$0xff]
    %v477 = vld [vmem:[#allocation5 + $0x138] sm:$0xff]
    %v478 = vld [vmem:[#allocation5 + $0x140] sm:$0xff]
    %v479 = vld [vmem:[#allocation5 + $0x148] sm:$0xff]
    %v480 = vld [vmem:[#allocation5 + $0x150] sm:$0xff]
    %v481 = vld [vmem:[#allocation5 + $0x158] sm:$0xff]
    %v482 = vld [vmem:[#allocation5 + $0x160] sm:$0xff]
    %v483 = vld [vmem:[#allocation5 + $0x168] sm:$0xff]
    %v484 = vld [vmem:[#allocation5 + $0x170] sm:$0xff]
    %v485 = vld [vmem:[#allocation5 + $0x178] sm:$0xff]
    %v486 = vld [vmem:[#allocation5 + $0x180] sm:$0xff]
    %v487 = vld [vmem:[#allocation5 + $0x188] sm:$0xff]
    %v488 = vld [vmem:[#allocation5 + $0x190] sm:$0xff]
    %v489 = vld [vmem:[#allocation5 + $0x198] sm:$0xff]
    %v490 = vld [vmem:[#allocation5 + $0x1a0] sm:$0xff]
    %v491 = vld [vmem:[#allocation5 + $0x1a8] sm:$0xff]
    %v492 = vld [vmem:[#allocation5 + $0x1b0] sm:$0xff]
    %v493 = vld [vmem:[#allocation5 + $0x1b8] sm:$0xff]
    %v494 = vld [vmem:[#allocation5 + $0x1c0] sm:$0xff]
    %v495 = vld [vmem:[#allocation5 + $0x1c8] sm:$0xff]
    %v496 = vld [vmem:[#allocation5 + $0x1d0] sm:$0xff]
    %v497 = vld [vmem:[#allocation5 + $0x1d8] sm:$0xff]
    %v498 = vld [vmem:[#allocation5 + $0x1e0] sm:$0xff]
    %v499 = vld [vmem:[#allocation5 + $0x1e8] sm:$0xff]
    %v500 = vld [vmem:[#allocation5 + $0x1f0] sm:$0xff]
    %v501 = vld [vmem:[#allocation5 + $0x1f8] sm:$0xff]
    %v566 = vunpack.c.l.b16 %v438
    %v567 = vunpack.c.h.b16 %v438
    %v568 = vunpack.c.l.b16 %v439
    %v569 = vunpack.c.h.b16 %v439
    %v570 = vunpack.c.l.b16 %v440
    %v571 = vunpack.c.h.b16 %v440
    %v572 = vunpack.c.l.b16 %v441
    %v573 = vunpack.c.h.b16 %v441
    %v574 = vunpack.c.l.b16 %v442
    %v575 = vunpack.c.h.b16 %v442
    %v576 = vunpack.c.l.b16 %v443
    %v577 = vunpack.c.h.b16 %v443
    %v578 = vunpack.c.l.b16 %v444
    %v579 = vunpack.c.h.b16 %v444
    %v580 = vunpack.c.l.b16 %v445
    %v581 = vunpack.c.h.b16 %v445
    %v582 = vunpack.c.l.b16 %v446
    %v583 = vunpack.c.h.b16 %v446
    %v584 = vunpack.c.l.b16 %v447
    %v585 = vunpack.c.h.b16 %v447
    %v586 = vunpack.c.l.b16 %v448
    %v587 = vunpack.c.h.b16 %v448
    %v588 = vunpack.c.l.b16 %v449
    %v589 = vunpack.c.h.b16 %v449
    %v590 = vunpack.c.l.b16 %v450
    %v591 = vunpack.c.h.b16 %v450
    %v592 = vunpack.c.l.b16 %v451
    %v593 = vunpack.c.h.b16 %v451
    %v594 = vunpack.c.l.b16 %v452
    %v595 = vunpack.c.h.b16 %v452
    %v596 = vunpack.c.l.b16 %v453
    %v597 = vunpack.c.h.b16 %v453
    %v598 = vunpack.c.l.b16 %v454
    %v599 = vunpack.c.h.b16 %v454
    %v600 = vunpack.c.l.b16 %v455
    %v601 = vunpack.c.h.b16 %v455
    %v602 = vunpack.c.l.b16 %v456
    %v603 = vunpack.c.h.b16 %v456
    %v604 = vunpack.c.l.b16 %v457
    %v605 = vunpack.c.h.b16 %v457
    %v606 = vunpack.c.l.b16 %v458
    %v607 = vunpack.c.h.b16 %v458
    %v608 = vunpack.c.l.b16 %v459
    %v609 = vunpack.c.h.b16 %v459
    %v610 = vunpack.c.l.b16 %v460
    %v611 = vunpack.c.h.b16 %v460
    %v612 = vunpack.c.l.b16 %v461
    %v613 = vunpack.c.h.b16 %v461
    %v614 = vunpack.c.l.b16 %v462
    %v615 = vunpack.c.h.b16 %v462
    %v616 = vunpack.c.l.b16 %v463
    %v617 = vunpack.c.h.b16 %v463
    %v618 = vunpack.c.l.b16 %v464
    %v619 = vunpack.c.h.b16 %v464
    %v620 = vunpack.c.l.b16 %v465
    %v621 = vunpack.c.h.b16 %v465
    %v622 = vunpack.c.l.b16 %v466
    %v623 = vunpack.c.h.b16 %v466
    %v624 = vunpack.c.l.b16 %v467
    %v625 = vunpack.c.h.b16 %v467
    %v626 = vunpack.c.l.b16 %v468
    %v627 = vunpack.c.h.b16 %v468
    %v628 = vunpack.c.l.b16 %v469
    %v629 = vunpack.c.h.b16 %v469
    %v630 = vunpack.c.l.b16 %v470
    %v631 = vunpack.c.h.b16 %v470
    %v632 = vunpack.c.l.b16 %v471
    %v633 = vunpack.c.h.b16 %v471
    %v634 = vunpack.c.l.b16 %v472
    %v635 = vunpack.c.h.b16 %v472
    %v636 = vunpack.c.l.b16 %v473
    %v637 = vunpack.c.h.b16 %v473
    %v638 = vunpack.c.l.b16 %v474
    %v639 = vunpack.c.h.b16 %v474
    %v640 = vunpack.c.l.b16 %v475
    %v641 = vunpack.c.h.b16 %v475
    %v642 = vunpack.c.l.b16 %v476
    %v643 = vunpack.c.h.b16 %v476
    %v644 = vunpack.c.l.b16 %v477
    %v645 = vunpack.c.h.b16 %v477
    %v646 = vunpack.c.l.b16 %v478
    %v647 = vunpack.c.h.b16 %v478
    %v648 = vunpack.c.l.b16 %v479
    %v649 = vunpack.c.h.b16 %v479
    %v650 = vunpack.c.l.b16 %v480
    %v651 = vunpack.c.h.b16 %v480
    %v652 = vunpack.c.l.b16 %v481
    %v653 = vunpack.c.h.b16 %v481
    %v654 = vunpack.c.l.b16 %v482
    %v655 = vunpack.c.h.b16 %v482
    %v656 = vunpack.c.l.b16 %v483
    %v657 = vunpack.c.h.b16 %v483
    %v658 = vunpack.c.l.b16 %v484
    %v659 = vunpack.c.h.b16 %v484
    %v660 = vunpack.c.l.b16 %v485
    %v661 = vunpack.c.h.b16 %v485
    %v662 = vunpack.c.l.b16 %v486
    %v663 = vunpack.c.h.b16 %v486
    %v664 = vunpack.c.l.b16 %v487
    %v665 = vunpack.c.h.b16 %v487
    %v666 = vunpack.c.l.b16 %v488
    %v667 = vunpack.c.h.b16 %v488
    %v668 = vunpack.c.l.b16 %v489
    %v669 = vunpack.c.h.b16 %v489
    %v670 = vunpack.c.l.b16 %v490
    %v671 = vunpack.c.h.b16 %v490
    %v672 = vunpack.c.l.b16 %v491
    %v673 = vunpack.c.h.b16 %v491
    %v674 = vunpack.c.l.b16 %v492
    %v675 = vunpack.c.h.b16 %v492
    %v676 = vunpack.c.l.b16 %v493
    %v677 = vunpack.c.h.b16 %v493
    %v678 = vunpack.c.l.b16 %v494
    %v679 = vunpack.c.h.b16 %v494
    %v680 = vunpack.c.l.b16 %v495
    %v681 = vunpack.c.h.b16 %v495
    %v682 = vunpack.c.l.b16 %v496
    %v683 = vunpack.c.h.b16 %v496
    %v684 = vunpack.c.l.b16 %v497
    %v685 = vunpack.c.h.b16 %v497
    %v686 = vunpack.c.l.b16 %v498
    %v687 = vunpack.c.h.b16 %v498
    %v688 = vunpack.c.l.b16 %v499
    %v689 = vunpack.c.h.b16 %v499
    %v690 = vunpack.c.l.b16 %v500
    %v691 = vunpack.c.h.b16 %v500
    %v692 = vunpack.c.l.b16 %v501
    %v693 = vunpack.c.h.b16 %v501
    %v694 = vpack.c.b16 %v568, %v566
    %v695 = vpack.c.b16 %v569, %v567
    %v696 = vpack.c.b16 %v572, %v570
    %v697 = vpack.c.b16 %v573, %v571
    %v698 = vpack.c.b16 %v576, %v574
    %v699 = vpack.c.b16 %v577, %v575
    %v700 = vpack.c.b16 %v580, %v578
    %v701 = vpack.c.b16 %v581, %v579
    %v702 = vpack.c.b16 %v584, %v582
    %v703 = vpack.c.b16 %v585, %v583
    %v704 = vpack.c.b16 %v588, %v586
    %v705 = vpack.c.b16 %v589, %v587
    %v706 = vpack.c.b16 %v592, %v590
    %v707 = vpack.c.b16 %v593, %v591
    %v708 = vpack.c.b16 %v596, %v594
    %v709 = vpack.c.b16 %v597, %v595
    %v710 = vpack.c.b16 %v600, %v598
    %v711 = vpack.c.b16 %v601, %v599
    %v712 = vpack.c.b16 %v604, %v602
    %v713 = vpack.c.b16 %v605, %v603
    %v714 = vpack.c.b16 %v608, %v606
    %v715 = vpack.c.b16 %v609, %v607
    %v716 = vpack.c.b16 %v612, %v610
    %v717 = vpack.c.b16 %v613, %v611
    %v718 = vpack.c.b16 %v616, %v614
    %v719 = vpack.c.b16 %v617, %v615
    %v720 = vpack.c.b16 %v620, %v618
    %v721 = vpack.c.b16 %v621, %v619
    %v722 = vpack.c.b16 %v624, %v622
    %v723 = vpack.c.b16 %v625, %v623
    %v724 = vpack.c.b16 %v628, %v626
    %v725 = vpack.c.b16 %v629, %v627
    %v726 = vpack.c.b16 %v632, %v630
    %v727 = vpack.c.b16 %v633, %v631
    %v728 = vpack.c.b16 %v636, %v634
    %v729 = vpack.c.b16 %v637, %v635
    %v730 = vpack.c.b16 %v640, %v638
    %v731 = vpack.c.b16 %v641, %v639
    %v732 = vpack.c.b16 %v644, %v642
    %v733 = vpack.c.b16 %v645, %v643
    %v734 = vpack.c.b16 %v648, %v646
    %v735 = vpack.c.b16 %v649, %v647
    %v736 = vpack.c.b16 %v652, %v650
    %v737 = vpack.c.b16 %v653, %v651
    %v738 = vpack.c.b16 %v656, %v654
    %v739 = vpack.c.b16 %v657, %v655
    %v740 = vpack.c.b16 %v660, %v658
    %v741 = vpack.c.b16 %v661, %v659
    %v742 = vpack.c.b16 %v664, %v662
    %v743 = vpack.c.b16 %v665, %v663
    %v744 = vpack.c.b16 %v668, %v666
    %v745 = vpack.c.b16 %v669, %v667
    %v746 = vpack.c.b16 %v672, %v670
    %v747 = vpack.c.b16 %v673, %v671
    %v748 = vpack.c.b16 %v676, %v674
    %v749 = vpack.c.b16 %v677, %v675
    %v750 = vpack.c.b16 %v680, %v678
    %v751 = vpack.c.b16 %v681, %v679
    %v752 = vpack.c.b16 %v684, %v682
    %v753 = vpack.c.b16 %v685, %v683
    %v754 = vpack.c.b16 %v688, %v686
    %v755 = vpack.c.b16 %v689, %v687
    %v756 = vpack.c.b16 %v692, %v690
    %v757 = vpack.c.b16 %v693, %v691
    %822 = vmatpush.bf16.msra.mxu0 %v708
    %823 = vmatpush.bf16.msra.mxu0 %v706
    %824 = vmatpush.bf16.msra.mxu0 %v704
    %825 = vmatpush.bf16.msra.mxu0 %v702
    %826 = vmatpush.bf16.msra.mxu0 %v700
    %827 = vmatpush.bf16.msra.mxu0 %v698
    %828 = vmatpush.bf16.msra.mxu0 %v696
    %829 = vmatpush.bf16.msra.mxu0 %v694
    %830 = vmatmul.bf16.gmra.mxu0 %v434
    %v831 = vpop.f32.mrf.mxu0
    %v832 = vadd.f32 0.0, %v831
    %v833 = vpop.f32.mrf.mxu0
    %834 = vdwg.mxu0
    %835 = vmatpush.bf16.msra.mxu0 %v724
    %836 = vmatpush.bf16.msra.mxu0 %v722
    %837 = vmatpush.bf16.msra.mxu0 %v720
    %838 = vmatpush.bf16.msra.mxu0 %v718
    %839 = vmatpush.bf16.msra.mxu0 %v716
    %840 = vmatpush.bf16.msra.mxu0 %v714
    %841 = vmatpush.bf16.msra.mxu0 %v712
    %842 = vmatpush.bf16.msra.mxu0 %v710
    %843 = vmatmul.bf16.gmra.mxu0 %v435
    %v844 = vpop.f32.mrf.mxu0
    %v845 = vadd.f32 %v832, %v844
    %v846 = vpop.f32.mrf.mxu0
    %847 = vdwg.mxu0
    %848 = vmatpush.bf16.msra.mxu0 %v740
    %849 = vmatpush.bf16.msra.mxu0 %v738
    %850 = vmatpush.bf16.msra.mxu0 %v736
    %851 = vmatpush.bf16.msra.mxu0 %v734
    %852 = vmatpush.bf16.msra.mxu0 %v732
    %853 = vmatpush.bf16.msra.mxu0 %v730
    %854 = vmatpush.bf16.msra.mxu0 %v728
    %855 = vmatpush.bf16.msra.mxu0 %v726
    %856 = vmatmul.bf16.gmra.mxu0 %v436
    %v857 = vpop.f32.mrf.mxu0
    %v858 = vadd.f32 %v845, %v857
    %v859 = vpop.f32.mrf.mxu0
    %860 = vdwg.mxu0
    %861 = vmatpush.bf16.msra.mxu0 %v756
    %862 = vmatpush.bf16.msra.mxu0 %v754
    %863 = vmatpush.bf16.msra.mxu0 %v752
    %864 = vmatpush.bf16.msra.mxu0 %v750
    %865 = vmatpush.bf16.msra.mxu0 %v748
    %866 = vmatpush.bf16.msra.mxu0 %v746
    %867 = vmatpush.bf16.msra.mxu0 %v744
    %868 = vmatpush.bf16.msra.mxu0 %v742
    %869 = vmatmul.bf16.gmra.mxu0 %v437
    %v870 = vpop.f32.mrf.mxu0
    %v871 = vadd.f32 %v858, %v870
    %v872 = vpop.f32.mrf.mxu0
    %873 = vdwg.mxu0
    %874 = vmatpush.bf16.msra.mxu0 %v709
    %875 = vmatpush.bf16.msra.mxu0 %v707
    %876 = vmatpush.bf16.msra.mxu0 %v705
    %877 = vmatpush.bf16.msra.mxu0 %v703
    %878 = vmatpush.bf16.msra.mxu0 %v701
    %879 = vmatpush.bf16.msra.mxu0 %v699
    %880 = vmatpush.bf16.msra.mxu0 %v697
    %881 = vmatpush.bf16.msra.mxu0 %v695
    %882 = vmatmul.bf16.gmra.mxu0 %v434
    %v883 = vpop.f32.mrf.mxu0
    %v884 = vadd.f32 0.0, %v883
    %v885 = vpop.f32.mrf.mxu0
    %886 = vdwg.mxu0
    %887 = vmatpush.bf16.msra.mxu0 %v725
    %888 = vmatpush.bf16.msra.mxu0 %v723
    %889 = vmatpush.bf16.msra.mxu0 %v721
    %890 = vmatpush.bf16.msra.mxu0 %v719
    %891 = vmatpush.bf16.msra.mxu0 %v717
    %892 = vmatpush.bf16.msra.mxu0 %v715
    %893 = vmatpush.bf16.msra.mxu0 %v713
    %894 = vmatpush.bf16.msra.mxu0 %v711
    %895 = vmatmul.bf16.gmra.mxu0 %v435
    %v896 = vpop.f32.mrf.mxu0
    %v897 = vadd.f32 %v884, %v896
    %v898 = vpop.f32.mrf.mxu0
    %899 = vdwg.mxu0
    %900 = vmatpush.bf16.msra.mxu0 %v741
    %901 = vmatpush.bf16.msra.mxu0 %v739
    %902 = vmatpush.bf16.msra.mxu0 %v737
    %903 = vmatpush.bf16.msra.mxu0 %v735
    %904 = vmatpush.bf16.msra.mxu0 %v733
    %905 = vmatpush.bf16.msra.mxu0 %v731
    %906 = vmatpush.bf16.msra.mxu0 %v729
    %907 = vmatpush.bf16.msra.mxu0 %v727
    %908 = vmatmul.bf16.gmra.mxu0 %v436
    %v909 = vpop.f32.mrf.mxu0
    %v910 = vadd.f32 %v897, %v909
    %v911 = vpop.f32.mrf.mxu0
    %912 = vdwg.mxu0
    %913 = vmatpush.bf16.msra.mxu0 %v757
    %914 = vmatpush.bf16.msra.mxu0 %v755
    %915 = vmatpush.bf16.msra.mxu0 %v753
    %916 = vmatpush.bf16.msra.mxu0 %v751
    %917 = vmatpush.bf16.msra.mxu0 %v749
    %918 = vmatpush.bf16.msra.mxu0 %v747
    %919 = vmatpush.bf16.msra.mxu0 %v745
    %920 = vmatpush.bf16.msra.mxu0 %v743
    %921 = vmatmul.bf16.gmra.mxu0 %v437
    %v922 = vpop.f32.mrf.mxu0
    %v923 = vadd.f32 %v910, %v922
    %v924 = vpop.f32.mrf.mxu0
    %925 = vdwg.mxu0
    %v926 = vxor.u32 %v871, 2147483648
    %v927 = vxor.u32 %v923, 2147483648
    %v928 = vmul.f32 %v926, 1.442695
    %v929 = vpow.pop %v928
    %v930 = vmul.f32 %v927, 1.442695
    %v931 = vpow.pop %v930
    %v932 = vadd.f32 %v929, 1.0
    %v933 = vadd.f32 %v931, 1.0
    %v934 = vrcp.pop %v932
    %v935 = vmul.f32 %v932, %v934
    %v936 = vsub.f32 1.0, %v935
    %v937 = vmul.f32 %v934, %v936
    %v938 = vadd.f32 %v934, %v937
    %vm939 = vweird.f32 %v932
    %vm940 = vweird.f32 %v934
    %vm941 = vmor %vm939, %vm940
    %v942 = vsel %vm941, %v934, %v938
    %v943 = vand.u32 2147483647, %v932
    %vm944 = vcmp.eq.f32.partialorder %v943, 8.507059e+37
    %v945 = vand.u32 %v932, 2147483648
    %v946 = vor.u32 1.1754944e-38, %v945
    %v947 = vsel %vm944, %v946, %v942
    %v948 = vmul.f32 1.0, %v947
    %v949 = vrcp.pop %v933
    %v950 = vmul.f32 %v933, %v949
    %v951 = vsub.f32 1.0, %v950
    %v952 = vmul.f32 %v949, %v951
    %v953 = vadd.f32 %v949, %v952
    %vm954 = vweird.f32 %v933
    %vm955 = vweird.f32 %v949
    %vm956 = vmor %vm954, %vm955
    %v957 = vsel %vm956, %v949, %v953
    %v958 = vand.u32 2147483647, %v933
    %vm959 = vcmp.eq.f32.partialorder %v958, 8.507059e+37
    %v960 = vand.u32 %v933, 2147483648
    %v961 = vor.u32 1.1754944e-38, %v960
    %v962 = vsel %vm959, %v961, %v957
    %v963 = vmul.f32 1.0, %v962
    %v966 = vrot.slane %v963, 7
    %vm967 = vcmask 1040384
    %v968 = vsel %vm967, %v948, %v966
    %v969 = vsel %vm159, %v948, %v966
    %v970 = vrot.slane %v969, 1
    %v971 = vperm.slane %v968, 0
    %v972 = vperm.slane %v968, 1
    %v973 = vperm.slane %v970, 0
    %v974 = vperm.slane %v970, 1
    %v979 = vmul.f32 %v319, %v971
    %v980 = vmul.f32 %v320, %v972
    %v981 = vmul.f32 %v321, %v971
    %v982 = vmul.f32 %v322, %v972
    %v983 = vmul.f32 %v323, %v971
    %v984 = vmul.f32 %v324, %v972
    %v985 = vmul.f32 %v325, %v971
    %v986 = vmul.f32 %v326, %v972
    %v987 = vmul.f32 %v327, %v973
    %v988 = vmul.f32 %v328, %v974
    %v989 = vmul.f32 %v329, %v973
    %v990 = vmul.f32 %v330, %v974
    %v991 = vmul.f32 %v331, %v973
    %v992 = vmul.f32 %v332, %v974
    %v993 = vmul.f32 %v333, %v973
    %v994 = vmul.f32 %v334, %v974
    %995 = vst [vmem:[#allocation7] sm:$0xff] %v979
    %996 = vst [vmem:[#allocation7 + $0x8] sm:$0xff] %v980
    %997 = vst [vmem:[#allocation7 + $0x10] sm:$0xff] %v981
    %998 = vst [vmem:[#allocation7 + $0x18] sm:$0xff] %v982
    %999 = vst [vmem:[#allocation7 + $0x20] sm:$0xff] %v983
    %1000 = vst [vmem:[#allocation7 + $0x28] sm:$0xff] %v984
    %1001 = vst [vmem:[#allocation7 + $0x30] sm:$0xff] %v985
    %1002 = vst [vmem:[#allocation7 + $0x38] sm:$0xff] %v986
    %1003 = vst [vmem:[#allocation7 + $0x40] sm:$0xff] %v987
    %1004 = vst [vmem:[#allocation7 + $0x48] sm:$0xff] %v988
    %1005 = vst [vmem:[#allocation7 + $0x50] sm:$0xff] %v989
    %1006 = vst [vmem:[#allocation7 + $0x58] sm:$0xff] %v990
    %1007 = vst [vmem:[#allocation7 + $0x60] sm:$0xff] %v991
    %1008 = vst [vmem:[#allocation7 + $0x68] sm:$0xff] %v992
    %1009 = vst [vmem:[#allocation7 + $0x70] sm:$0xff] %v993
    %1010 = vst [vmem:[#allocation7 + $0x78] sm:$0xff] %v994
    // Predicated region
    $region26: #{tpu_custom_call.1} parent=1 // pred_check
      _
    $region27: #{tpu_custom_call.1} parent=1 // pred_check_branch
      %1012 = sbr.rel (0) target = $region29
    $region28: #{tpu_custom_call.1} parent=1 // pred_region
      %1014 = vsyncadd [#allocation4], 0
      %s1015 = sshll.u32 [#allocation7], 4
      %s1016 = int_to_ptr.vmem [resolvable:$true] %s1015
      %s1017 = sshll.u32 %s4, 4
      %s1018 = int_to_ptr.hbm [resolvable:$true] %s1017
      %1023 = dma.vmem_to_hbm [thread:$0]  %s1016, 2048, %s1018, [#allocation4], 256, 256, 16
    $region29: #{tpu_custom_call.1} parent=1 // pred_fallthru
      _
    // Predicated region
    $region30: #{tpu_custom_call.1} parent=1 // pred_check
      _
    $region31: #{tpu_custom_call.1} parent=1 // pred_check_branch
      %1025 = sbr.rel (0) target = $region33
    $region32: #{tpu_custom_call.1} parent=1 // pred_region
      %1027 = dma.done [#allocation4], 2048
    $region33: #{tpu_custom_call.1} parent=1 // pred_fallthru
      _
    %1028 = vsyncpa [#allocation3], 1
    %1029 = vsyncpa [#allocation6], 1
    %1030 = vsyncpa [#allocation4], 1

</llo_original>
